<compile_context>
chip_gen: v7x
topology: tpu7x:2x2x1
jax: 0.10.0
libtpu: 0.0.40
codegen_flags: <defaults>
</compile_context>

<pallas_src>
import functools

import jax
import jax.numpy as jnp
from jax.experimental import pallas as pl
from jax.experimental.pallas import tpu as pltpu


def _ls_ce_kernel(logits_ref, target_ref, loss_ref, *, conf, smooth_over_c):
    """Per-row label-smoothed CE for one (TM, C) block of logits.

    loss_row = logsumexp(x) - conf * x[target] - (smoothing / C) * sum(x)
    (algebraically identical to conf*nll + smoothing*(-mean(log_softmax))).
    """
    x = logits_ref[...].astype(jnp.float32)                  # (TM, C)
    t = target_ref[...]                                      # (TM, 1) int32

    # logsumexp along the class (lane) axis.
    m = jnp.max(x, axis=1, keepdims=True)                    # (TM, 1)
    lse = jnp.log(jnp.sum(jnp.exp(x - m), axis=1, keepdims=True))

    # Gather x[target] via one-hot compare (no dynamic gather on TPU) and the
    # plain row-sum needed for the smoothing term — both run on x directly.
    col = jax.lax.broadcasted_iota(jnp.int32, x.shape, 1)
    x_t = jnp.sum(jnp.where(col == t, x, 0.0), axis=1, keepdims=True)
    x_sum = jnp.sum(x, axis=1, keepdims=True)

    loss_ref[...] = (m + lse) - conf * x_t - smooth_over_c * x_sum


def _pick_block_rows(n, c, itemsize, vmem_budget_bytes=16 * 1024 * 1024):
    """Largest sublane-aligned row tile whose working set fits the VMEM budget.

    Dominant VMEM users per row: the double-buffered logits input
    (2 * C * itemsize bytes) plus roughly three f32 full-tile temporaries
    inside the kernel (cast, exp, select).  Budget kept conservative so the
    same tiling is safe on v7x (64 MiB physical / 32 MiB scoped VMEM) as well
    as v5e/v6e.
    """
    per_row = c * (2 * itemsize + 3 * 4)
    tm = vmem_budget_bytes // max(per_row, 1)
    n_rows = -(-n // 8) * 8          # n rounded up to a sublane multiple
    tm = max(8, min(1024, tm, n_rows))
    return (tm // 8) * 8


def label_smoothing_ce(logits, target, smoothing=0.1, reduction="mean",
                       block_rows=None):
    """Equivalent of LabelSmoothingCE(smoothing, reduction).forward.

    logits: (N, C) float array, target: (N,) int array.
    Returns a scalar for 'mean'/'sum', or an (N,) f32 vector for 'none'.
    """
    n, c = logits.shape
    conf = 1.0 - smoothing

    if block_rows is None:
        block_rows = _pick_block_rows(n, c, jnp.dtype(logits.dtype).itemsize)
    # TODO(synk): for vocab-scale C (32k+), add a second grid axis over classes
    # with an online logsumexp carry instead of requiring a full-C row tile.

    num_blocks = -(-n // block_rows)
    n_pad = num_blocks * block_rows
    if n_pad != n:
        # Zero-pad ragged rows; padded rows are computed but sliced off below.
        logits = jnp.pad(logits, ((0, n_pad - n), (0, 0)))
        target = jnp.pad(target, (0, n_pad - n))
    target_2d = target.astype(jnp.int32).reshape(n_pad, 1)

    kernel = functools.partial(
        _ls_ce_kernel, conf=conf, smooth_over_c=smoothing / float(c)
    )

    loss = pl.pallas_call(
        kernel,
        out_shape=jax.ShapeDtypeStruct((n_pad, 1), jnp.float32),
        grid_spec=pltpu.PrefetchScalarGridSpec(
            num_scalar_prefetch=0,
            grid=(num_blocks,),
            in_specs=[
                pl.BlockSpec((block_rows, c), lambda i: (i, 0)),
                pl.BlockSpec((block_rows, 1), lambda i: (i, 0)),
            ],
            out_specs=pl.BlockSpec((block_rows, 1), lambda i: (i, 0)),
        ),
        compiler_params=pltpu.CompilerParams(
            # Each grid step writes an independent output block → parallel axis
            # (lets v7x's two TensorCores split the row blocks).
            dimension_semantics=("parallel",),
            vmem_limit_bytes=32 * 1024 * 1024,
        ),
    )(logits, target_2d)

    loss = loss[:n, 0]
    if reduction == "mean":
        return jnp.mean(loss)
    if reduction == "sum":
        return jnp.sum(loss)
    return loss  # 'none'


def _reference(logits, target, smoothing=0.1):
    logp = jax.nn.log_softmax(logits.astype(jnp.float32), axis=1)
    nll = -jnp.take_along_axis(logp, target[:, None], axis=1)[:, 0]
    smoothed = -jnp.mean(logp, axis=1)
    loss = nll * (1.0 - smoothing) + smoothed * smoothing
    return jnp.mean(loss)


if __name__ == "__main__":
    key = jax.random.PRNGKey(0)
    k1, k2, k3, k4 = jax.random.split(key, 4)

    # Small shapes consistent with (n, n_classes) logits.
    N, C = 8, 32
    logits = jax.random.normal(k1, (N, C), dtype=jnp.float32)
    target = jax.random.randint(k2, (N,), 0, C, dtype=jnp.int32)

    out = label_smoothing_ce(logits, target, smoothing=0.1)
    out = jax.block_until_ready(out)
    ref = _reference(logits, target, smoothing=0.1)
    assert jnp.allclose(out, ref, atol=1e-5, rtol=1e-5), (out, ref)

    # Ragged batch (N not a multiple of the row tile) exercises the padding path.
    N2, C2 = 20, 32
    logits2 = jax.random.normal(k3, (N2, C2), dtype=jnp.float32)
    target2 = jax.random.randint(k4, (N2,), 0, C2, dtype=jnp.int32)

    out2 = label_smoothing_ce(logits2, target2, smoothing=0.1)
    out2 = jax.block_until_ready(out2)
    ref2 = _reference(logits2, target2, smoothing=0.1)
    assert jnp.allclose(out2, ref2, atol=1e-5, rtol=1e-5), (out2, ref2)

    print("KERNEL_OK")
</pallas_src>

<mosaic_0001>
module attributes {stable_mosaic.version = 11 : i64} {
  func.func @_ls_ce_kernel(%arg0: i32, %arg1: memref<8x32xf32, #tpu.memory_space<vmem>>, %arg2: memref<8x1xi32, #tpu.memory_space<vmem>>, %arg3: memref<8x1xf32, #tpu.memory_space<vmem>>) attributes {dimension_semantics = [#tpu.dimension_semantics<parallel>], iteration_bounds = array<i64: 1>, scalar_prefetch = 0 : i64, scratch_operands = 0 : i64, tpu.core_type = #tpu.core_type<tc>, window_params = [{transform_indices = @transform_0, window_bounds = array<i64: 8, 32>}, {transform_indices = @transform_1, window_bounds = array<i64: 8, 1>}, {transform_indices = @transform_2, window_bounds = array<i64: 8, 1>}]} {
    %c0 = arith.constant 0 : index
    %c0_0 = arith.constant 0 : index
    %0 = vector.load %arg1[%c0, %c0_0] : memref<8x32xf32, #tpu.memory_space<vmem>>, vector<8x32xf32>
    %c0_1 = arith.constant 0 : index
    %c0_2 = arith.constant 0 : index
    %1 = vector.load %arg2[%c0_1, %c0_2] : memref<8x1xi32, #tpu.memory_space<vmem>>, vector<8x1xi32>
    %cst = arith.constant dense<0xFF800000> : vector<8xf32>
    %2 = vector.multi_reduction <maximumf>, %0, %cst [1] : vector<8x32xf32> to vector<8xf32>
    %3 = vector.shape_cast %2 : vector<8xf32> to vector<8x1xf32>
    %4 = vector.broadcast %3 : vector<8x1xf32> to vector<8x32xf32>
    %5 = arith.subf %0, %4 : vector<8x32xf32>
    %6 = math.exp %5 : vector<8x32xf32>
    %cst_3 = arith.constant dense<0.000000e+00> : vector<8xf32>
    %7 = vector.multi_reduction <add>, %6, %cst_3 [1] : vector<8x32xf32> to vector<8xf32>
    %8 = vector.shape_cast %7 : vector<8xf32> to vector<8x1xf32>
    %9 = math.log %8 : vector<8x1xf32>
    %10 = tpu.iota {dimensions = array<i32: 1>} : vector<8x32xi32>
    %11 = vector.broadcast %1 : vector<8x1xi32> to vector<8x32xi32>
    %12 = arith.cmpi eq, %10, %11 : vector<8x32xi32>
    %cst_4 = arith.constant 0.000000e+00 : f32
    %13 = vector.broadcast %cst_4 : f32 to vector<8x32xf32>
    %14 = arith.select %12, %0, %13 : vector<8x32xi1>, vector<8x32xf32>
    %cst_5 = arith.constant dense<0.000000e+00> : vector<8xf32>
    %15 = vector.multi_reduction <add>, %14, %cst_5 [1] : vector<8x32xf32> to vector<8xf32>
    %16 = vector.shape_cast %15 : vector<8xf32> to vector<8x1xf32>
    %cst_6 = arith.constant dense<0.000000e+00> : vector<8xf32>
    %17 = vector.multi_reduction <add>, %0, %cst_6 [1] : vector<8x32xf32> to vector<8xf32>
    %18 = vector.shape_cast %17 : vector<8xf32> to vector<8x1xf32>
    %19 = arith.addf %3, %9 : vector<8x1xf32>
    %cst_7 = arith.constant 0.899999976 : f32
    %20 = vector.broadcast %cst_7 : f32 to vector<8x1xf32>
    %21 = arith.mulf %20, %16 : vector<8x1xf32>
    %22 = arith.subf %19, %21 : vector<8x1xf32>
    %cst_8 = arith.constant 3.125000e-03 : f32
    %23 = vector.broadcast %cst_8 : f32 to vector<8x1xf32>
    %24 = arith.mulf %23, %18 : vector<8x1xf32>
    %25 = arith.subf %22, %24 : vector<8x1xf32>
    %c0_9 = arith.constant 0 : index
    %c0_10 = arith.constant 0 : index
    %26 = vector.load %arg3[%c0_9, %c0_10] : memref<8x1xf32, #tpu.memory_space<vmem>>, vector<8x1xf32>
    tpu.vector_store %arg3[%c0_9, %c0_10], %25 {strides = array<i32>} : memref<8x1xf32, #tpu.memory_space<vmem>>, vector<8x1xf32>,
    return
  }
  func.func @transform_0(%arg0: i32) -> (i32, i32) {
    %c0_i32 = arith.constant 0 : i32
    %c0_i32_0 = arith.constant 0 : i32
    return %arg0, %c0_i32 : i32, i32
  }
  func.func @transform_1(%arg0: i32) -> (i32, i32) {
    %c0_i32 = arith.constant 0 : i32
    %c0_i32_0 = arith.constant 0 : i32
    return %arg0, %c0_i32 : i32, i32
  }
  func.func @transform_2(%arg0: i32) -> (i32, i32) {
    %c0_i32 = arith.constant 0 : i32
    %c0_i32_0 = arith.constant 0 : i32
    return %arg0, %c0_i32 : i32, i32
  }
}

</mosaic_0001>

<llo_original>
// kernel: tpu_custom_call.1
$region0: #{tpu_custom_call.1}
  #allocation0 [shape = 'u32[]', space=smem, size = 0x4, offset = 0x4, fixed_abs, tag = 'smem constant byte address 0x4 - core index']
  #allocation1 [shape = 'u32[144,128]{1,0:T(1,128)}', space=vmem, size = 0x12000, scoped, tag = 'internal scratch']
  %s0 = inlined_call_operand.vmem [shape: f32[8,32], index: 0, kind: input, shape index: {}]
  %s1 = inlined_call_operand.vmem [shape: s32[8,1], index: 1, kind: input, shape index: {}]
  %s2 = inlined_call_operand.vmem [shape: f32[8,1], index: 2, kind: output, shape index: {}]
  %s3 = sld [smem:[#allocation0]]
  $region18: #{tpu_custom_call.1} parent=0
    _
  %s5 = ssub.s32 1, %s3
  %s6 = scalar_select 0, %s5, %s3
  // Predicated region
  $region2: #{tpu_custom_call.1} parent=0 // pred_check
    _
  $region3: #{tpu_custom_call.1} parent=0 // pred_check_branch
    %8 = sbr.rel (0) target = $region5
  $region4: #{tpu_custom_call.1} parent=0 // pred_region
    _
  $region5: #{tpu_custom_call.1} parent=0 // pred_fallthru
    _
  // Predicated region
  $region6: #{tpu_custom_call.1} parent=0 // pred_check
    _
  $region7: #{tpu_custom_call.1} parent=0 // pred_check_branch
    %10 = sbr.rel (0) target = $region9
  $region8: #{tpu_custom_call.1} parent=0 // pred_region
    _
  $region9: #{tpu_custom_call.1} parent=0 // pred_fallthru
    _
  %v11 = vld [vmem:[%s0] sm:$0xff]
  %v12 = vld [vmem:[%s1] sm:$0xff]
  %vm13 = vcmask 261120
  %v14 = vsel %vm13, %v11, -inf
  %15 = vmax.xlane.f32.xlu0 %v14
  %v16 = vpop.xlane.xlu0 %15
  %v17 = vsub.f32 %v11, %v16
  %v18 = vmul.f32 %v17, 1.442695
  %v19 = vpow.pop %v18
  %v20 = vsel %vm13, %v19, 0.0
  %21 = vadd.xlane.f32.xlu0 %v20
  %v22 = vpop.xlane.xlu0 %21
  %v23 = vlog2.pop %v22
  %v24 = vmul.f32 %v23, 0.6931472
  %v25 = vlaneseq
  %v26 = vand.u32 %v25, 127
  %27 = vset.pattern.permute.xlu0 0
  %28 = vperm.xlu0 %27, %v12
  %v29 = vpop.permute.xlu0 %28
  %vm30 = vcmp.eq.s32.totalorder %v26, %v29
  %v31 = vsel %vm30, %v11, 0.0
  %v32 = vsel %vm13, %v31, 0.0
  %33 = vadd.xlane.f32.xlu0 %v32
  %v34 = vpop.xlane.xlu0 %33
  %v35 = vsel %vm13, %v11, 0.0
  %36 = vadd.xlane.f32.xlu0 %v35
  %v37 = vpop.xlane.xlu0 %36
  %v38 = vadd.f32 %v16, %v24
  %v39 = vmul.f32 %v34, 0.9
  %v40 = vsub.f32 %v38, %v39
  %v41 = vmul.f32 %v37, 0.003125
  %v42 = vsub.f32 %v40, %v41
  %vm43 = vcmask 7168
  %44 = vst.msk [vmem:[%s2] sm:$0xff] %vm43, %v42
  // Predicated region
  $region10: #{tpu_custom_call.1} parent=0 // pred_check
    _
  $region11: #{tpu_custom_call.1} parent=0 // pred_check_branch
    %46 = sbr.rel (0) target = $region13
  $region12: #{tpu_custom_call.1} parent=0 // pred_region
    _
  $region13: #{tpu_custom_call.1} parent=0 // pred_fallthru
    _
  // Predicated region
  $region14: #{tpu_custom_call.1} parent=0 // pred_check
    _
  $region15: #{tpu_custom_call.1} parent=0 // pred_check_branch
    %48 = sbr.rel (0) target = $region17
  $region16: #{tpu_custom_call.1} parent=0 // pred_region
    _
  $region17: #{tpu_custom_call.1} parent=0 // pred_fallthru
    _

</llo_original>
